<compile_context>
chip_gen: v6e
topology: v6e:2x2x1
jax: 0.10.0
libtpu: 0.0.40
codegen_flags: <defaults>
</compile_context>

<pallas_src>
import functools

import jax
import jax.numpy as jnp
import numpy as np
from jax import lax
from jax.experimental import pallas as pl
from jax.experimental.pallas import tpu as pltpu

# ---------------- module config (mirrors Embeddings / Encoder.__init__) -------
EMBEDDING_DIM = 32
POSITION_ENCODING = True
FEAT_MERGE = "sum"          # feature embeddings share EMBEDDING_DIM and are summed
DROPOUT_P = 0.1             # nn.Dropout -> identity here (inference / eval mode)
PADDING_IDX = 1
NUM_WORD_EMBEDDINGS = 64
NUM_FEAT_EMBEDDINGS = [16]  # one extra feature LUT
MAX_LEN = 5000              # same as make_positional_encodings(dim, 5000)
NUM_LAYERS = 2              # Encoder(num_layers) for the 'mean' encoder head
# NOTE: later OpenNMT versions scale the merged embedding by sqrt(embedding_dim);
# the version ported here does not.  Set EMB_SCALE = sqrt(EMBEDDING_DIM) to match
# the scaled variant (applied consistently in kernel path and reference).
EMB_SCALE = 1.0

LANE = 128                  # TPU lane width
TARGET_RT4 = 256            # target packed lane-rows per tile (v6e MXU M dim)


def _round_up(x, m):
    return ((x + m - 1) // m) * m


def _cdiv(a, b):
    return (a + b - 1) // b


def make_positional_encodings(dim, max_len):
    """Exact port of Embeddings.make_positional_encodings -> (max_len, 1, dim)."""
    pos = jnp.arange(max_len, dtype=jnp.float32)[:, None]                  # (L, 1)
    div_term = 1.0 / jnp.power(
        10000.0, jnp.arange(0, dim * 2, 2, dtype=jnp.float32) / dim)       # (dim,)
    pe = pos * div_term[None, :]                                           # (L, dim)
    pe = pe.at[:, 0::2].set(jnp.sin(pe[:, 0::2]))
    pe = pe.at[:, 1::2].set(jnp.cos(pe[:, 1::2]))
    return pe[:, None, :]                                                  # (L, 1, dim)


# ------------------------------- Pallas kernel --------------------------------
def _embeddings_kernel(cols_ref, tab_ref, pe_ref, out_ref, *, pack, v_pad, vw):
    """One row-tile of the fused (word + feature + PE) embedding lookup.

    cols_ref: (RT4, 2*pack) int32 -- raw word ids in cols [0:pack], raw feature
                                     ids in cols [pack:2*pack] for the `pack`
                                     consecutive timesteps packed per lane-row.
    tab_ref : (pack*v_pad, 128) f32 -- block-diagonal [word;feat] LUT (resident).
    pe_ref  : (RT4, 128) f32       -- lane-packed PE rows for this tile.
    out_ref : (RT4, 128) f32       -- lane-dense packed embeddings.
    """
    rt4 = out_ref.shape[0]
    cols = cols_ref[...]                                             # (RT4, 2*pack)
    # One iota shared by all PACK blocks (hoisted; compares only span v_pad lanes).
    iota = lax.broadcasted_iota(jnp.int32, (rt4, v_pad), 1)
    acc = pe_ref[...]                                                # start from PE
    for p in range(pack):                                            # static unroll
        w = cols[:, p:p + 1]                                         # raw word id
        f = cols[:, pack + p:pack + p + 1] + vw                      # feat id + offset (immediate)
        # Disjoint ranges -> OR the two masks, convert once (two-hot chunk).
        hot = ((iota == w) | (iota == f)).astype(jnp.float32)        # (RT4, v_pad)
        # Accumulating MXU dot against this block's table slice: feat_merge='sum'
        # happens inside the matmul; output lanes [p*D,(p+1)*D) are lane-dense.
        acc = acc + jnp.dot(hot, tab_ref[p * v_pad:(p + 1) * v_pad, :],
                            preferred_element_type=jnp.float32)
    out_ref[...] = acc
    # TODO(synk): nn.Dropout omitted (eval-mode identity); torch RNG not reproducible.


# ------------------------- hoisted per-model preparation ----------------------
def build_embeddings(word_table, feat_table, emb_scale=EMB_SCALE, max_len=MAX_LEN):
    """Per-model prep, computed ONCE (never per forward call)."""
    vw, d = word_table.shape
    vf, df = feat_table.shape
    assert d == df and LANE % d == 0, "embedding_dim must divide 128"
    pack = LANE // d
    v = vw + vf
    v_pad = _round_up(v, 8)          # keeps every per-block table slice (8,128)-aligned

    tab = jnp.concatenate([word_table, feat_table], axis=0).astype(jnp.float32)
    tab = tab * emb_scale
    tab = jnp.pad(tab, ((0, v_pad - v), (0, 0)))
    # Block-diagonal replication: block p's dot lands its D lanes at offset p*D,
    # so the matmul output is already lane-dense (no masked 32-lane stores).
    tab_bd = jnp.kron(jnp.eye(pack, dtype=jnp.float32), tab)        # (pack*v_pad, 128)

    # PE packed `pack` timesteps per 128-lane row.  Batch-independent because the
    # kernel flattens rows batch-major; generous length so any L <= max_len fits
    # after per-batch tile rounding.
    max_len_pad = _round_up(max_len + TARGET_RT4 * pack, pack * 8)
    pe2d = make_positional_encodings(d, max_len_pad)[:, 0, :]        # (max_len_pad, D)
    pe_lane = pe2d.reshape(max_len_pad // pack, LANE)                # (rows4, 128)

    return dict(tab_bd=tab_bd, pe_lane=pe_lane,
                d=d, pack=pack, vw=vw, vf=vf, v_pad=v_pad)


def make_embeddings_forward(params):
    """Returns a jitted forward: src_input (L, B, 2) int -> (L, B, D) float32."""
    tab_bd = params["tab_bd"]
    pe_lane = params["pe_lane"]
    d, pack, vw, v_pad = params["d"], params["pack"], params["vw"], params["v_pad"]
    kernel = functools.partial(_embeddings_kernel, pack=pack, v_pad=v_pad, vw=vw)

    @jax.jit
    def forward(src_input):
        L, B, nfeat = src_input.shape
        assert nfeat == 2

        # --- tiling: tiles never straddle a batch (keeps the PE block index a
        #     pure function of the grid index); ~TARGET_RT4 lane-rows per tile.
        l4_raw = _cdiv(L, pack)
        t_pb = max(1, l4_raw // TARGET_RT4)             # tiles per batch
        rt4 = _round_up(_cdiv(l4_raw, t_pb), 8)         # packed lane-rows per tile
        l4 = rt4 * t_pb                                 # packed lane-rows per batch
        l_pad = l4 * pack                               # padded timesteps per batch
        assert l4 <= pe_lane.shape[0], "sequence longer than positional-encoding table"
        n_tiles = B * t_pb                              # even when B is even (v7x balance)

        # --- per-call prep: only this tiny int32 repack; all float prep is hoisted.
        ids = src_input.astype(jnp.int32).transpose(1, 0, 2)          # (B, L, 2) batch-major
        ids = jnp.pad(ids, ((0, 0), (0, l_pad - L), (0, 0)))          # pad time; id 0 in-range
        ids = ids.reshape(B * l4, pack, 2)
        cols = jnp.concatenate([ids[:, :, 0], ids[:, :, 1]], axis=1)  # (B*l4, 2*pack)

        pe_index = (lambda i: (0, 0)) if t_pb == 1 else (lambda i: (i % t_pb, 0))

        out_slab = pl.pallas_call(
            kernel,
            out_shape=jax.ShapeDtypeStruct((B * l4, LANE), jnp.float32),
            grid_spec=pltpu.PrefetchScalarGridSpec(
                num_scalar_prefetch=0,
                grid=(n_tiles,),
                in_specs=[
                    pl.BlockSpec((rt4, 2 * pack), lambda i: (i, 0)),
                    # Whole fused table, constant block index -> fetched once and
                    # resident across tiles.  TODO(synk): pl.Buffered(1) or a
                    # sync_copy-into-scratch would drop the 2x double-buffer copy.
                    pl.BlockSpec(tab_bd.shape, lambda i: (0, 0)),
                    # PE block repeats every t_pb tiles; for t_pb == 1 it is
                    # constant, so PE is DMA'd exactly once per call.
                    pl.BlockSpec((rt4, LANE), pe_index),
                ],
                out_specs=pl.BlockSpec((rt4, LANE), lambda i: (i, 0)),
            ),
            compiler_params=pltpu.CompilerParams(
                dimension_semantics=("parallel",)),   # shard tiles across v7x's 2 TCs
        )(cols, tab_bd, pe_lane)

        # Free row-major reinterpretation back to (L, B, D); padded rows sliced off.
        return out_slab.reshape(B, l_pad, d)[:, :L, :].transpose(1, 0, 2)

    return forward


def make_encoder_forward(embed_fn, encoder_type="mean", num_layers=NUM_LAYERS):
    """Encoder.forward for encoder_type='mean': returns ((mean, mean), emb)."""
    def forward(src_input, lengths=None, hidden=None):
        emb = embed_fn(src_input)
        if encoder_type == "mean":
            mean = jnp.broadcast_to(jnp.mean(emb, axis=0),
                                    (num_layers,) + emb.shape[1:])
            return (mean, mean), emb
        # TODO(synk): 'rnn'/'brnn' (nn.LSTM/GRU) and 'transformer' encoder stacks
        # (plus pack/unpack of padded sequences) are not translated to Pallas here.
        raise NotImplementedError(encoder_type)
    return forward


# ------------------------------- reference (plain JAX) ------------------------
def reference_embeddings(src_input, word_table, feat_table, pe):
    w = word_table[src_input[:, :, 0]]                 # (L, B, D)
    f = feat_table[src_input[:, :, 1]]                 # (L, B, D)
    emb = (w + f) * EMB_SCALE
    return emb + pe[: src_input.shape[0]]              # (L, 1, D) broadcast


if __name__ == "__main__":
    key = jax.random.PRNGKey(0)
    k_w, k_f, k1, k2, k3, k4 = jax.random.split(key, 6)

    # Deterministic parameter init (nn.Embedding weights, padding row zeroed).
    word_table = jax.random.normal(k_w, (NUM_WORD_EMBEDDINGS, EMBEDDING_DIM),
                                   dtype=jnp.float32) * 0.1
    word_table = word_table.at[PADDING_IDX].set(0.0)
    feat_table = jax.random.normal(k_f, (NUM_FEAT_EMBEDDINGS[0], EMBEDDING_DIM),
                                   dtype=jnp.float32) * 0.1
    feat_table = feat_table.at[PADDING_IDX].set(0.0)

    # Hoisted per-model prep (review item 1): fused LUT + packed PE built ONCE.
    params = build_embeddings(word_table, feat_table)
    embed_fn = make_embeddings_forward(params)
    encoder_fn = make_encoder_forward(embed_fn, encoder_type="mean",
                                      num_layers=NUM_LAYERS)

    pe_ref_table = make_positional_encodings(EMBEDDING_DIM, MAX_LEN)  # reference only

    def make_src(kw, kf, L, B):
        w = jax.random.randint(kw, (L, B), 0, NUM_WORD_EMBEDDINGS, dtype=jnp.int32)
        f = jax.random.randint(kf, (L, B), 0, NUM_FEAT_EMBEDDINGS[0], dtype=jnp.int32)
        w = w.at[0, 0].set(PADDING_IDX)                 # exercise padding row
        return jnp.stack([w, f], axis=2)                # (L, B, 2)

    # Small shape (one tile per batch, grid of 2).
    L, B = 8, 2
    src_small = make_src(k1, k2, L, B)
    out = jax.block_until_ready(embed_fn(src_small))
    ref = reference_embeddings(src_small, word_table, feat_table, pe_ref_table)
    assert out.shape == (L, B, EMBEDDING_DIM)
    assert np.allclose(np.asarray(out), np.asarray(ref), atol=1e-5, rtol=1e-5)

    # Larger shape (per-batch padding path, L=600 -> 608 padded, 2 balanced tiles).
    L2, B2 = 600, 2
    src_big = make_src(k3, k4, L2, B2)
    out2 = jax.block_until_ready(embed_fn(src_big))
    ref2 = reference_embeddings(src_big, word_table, feat_table, pe_ref_table)
    assert out2.shape == (L2, B2, EMBEDDING_DIM)
    assert np.allclose(np.asarray(out2), np.asarray(ref2), atol=1e-5, rtol=1e-5)

    # Encoder forward, encoder_type='mean': ((hidden, hidden), memory bank).
    (h, c), mem = encoder_fn(src_small)
    h = jax.block_until_ready(h)
    assert h.shape == (NUM_LAYERS, B, EMBEDDING_DIM)
    assert mem.shape == (L, B, EMBEDDING_DIM)
    assert np.allclose(np.asarray(h[0]), np.asarray(ref.mean(axis=0)),
                       atol=1e-5, rtol=1e-5)

    print("KERNEL_OK")
</pallas_src>

<mosaic_0001>
module attributes {stable_mosaic.version = 11 : i64} {
  func.func @_embeddings_kernel(%arg0: i32, %arg1: memref<8x8xi32, #tpu.memory_space<vmem>>, %arg2: memref<320x128xf32, #tpu.memory_space<vmem>>, %arg3: memref<8x128xf32, #tpu.memory_space<vmem>>, %arg4: memref<8x128xf32, #tpu.memory_space<vmem>>) attributes {dimension_semantics = [#tpu.dimension_semantics<parallel>], iteration_bounds = array<i64: 2>, scalar_prefetch = 0 : i64, scratch_operands = 0 : i64, tpu.core_type = #tpu.core_type<tc>, window_params = [{transform_indices = @transform_0, window_bounds = array<i64: 8, 8>}, {pipeline_mode = #tpu.pipeline_mode<synchronous>, transform_indices = @transform_1, window_bounds = array<i64: 320, 128>}, {transform_indices = @transform_2, window_bounds = array<i64: 8, 128>}, {transform_indices = @transform_3, window_bounds = array<i64: 8, 128>}]} {
    %c0 = arith.constant 0 : index
    %c0_0 = arith.constant 0 : index
    %0 = vector.load %arg1[%c0, %c0_0] : memref<8x8xi32, #tpu.memory_space<vmem>>, vector<8x8xi32>
    %1 = tpu.iota {dimensions = array<i32: 1>} : vector<8x80xi32>
    %c0_1 = arith.constant 0 : index
    %c0_2 = arith.constant 0 : index
    %2 = vector.load %arg3[%c0_1, %c0_2] : memref<8x128xf32, #tpu.memory_space<vmem>>, vector<8x128xf32>
    %3 = vector.extract_strided_slice %0 {offsets = [0, 0], sizes = [8, 1], strides = [1, 1]} : vector<8x8xi32> to vector<8x1xi32>
    %4 = vector.extract_strided_slice %0 {offsets = [0, 4], sizes = [8, 1], strides = [1, 1]} : vector<8x8xi32> to vector<8x1xi32>
    %c64_i32 = arith.constant 64 : i32
    %5 = vector.broadcast %c64_i32 : i32 to vector<8x1xi32>
    %6 = arith.addi %4, %5 : vector<8x1xi32>
    %7 = vector.broadcast %3 : vector<8x1xi32> to vector<8x80xi32>
    %8 = arith.cmpi eq, %1, %7 : vector<8x80xi32>
    %9 = vector.broadcast %6 : vector<8x1xi32> to vector<8x80xi32>
    %10 = arith.cmpi eq, %1, %9 : vector<8x80xi32>
    %11 = arith.ori %8, %10 : vector<8x80xi1>
    %12 = arith.extui %11 : vector<8x80xi1> to vector<8x80xi32>
    %13 = arith.sitofp %12 : vector<8x80xi32> to vector<8x80xf32>
    %c0_3 = arith.constant 0 : index
    %c0_4 = arith.constant 0 : index
    %14 = vector.load %arg2[%c0_3, %c0_4] : memref<320x128xf32, #tpu.memory_space<vmem>>, vector<80x128xf32>
    %cst = arith.constant dense<0.000000e+00> : vector<8x128xf32>
    %15 = tpu.matmul %13, %14, %cst {dimension_numbers = #tpu.dot_dimension_numbers<[1], [0], [0], [1], [0, 0, 1, 1], [], []>} : vector<8x80xf32>, vector<80x128xf32>, vector<8x128xf32> -> vector<8x128xf32>
    %16 = arith.addf %2, %15 : vector<8x128xf32>
    %17 = vector.extract_strided_slice %0 {offsets = [0, 1], sizes = [8, 1], strides = [1, 1]} : vector<8x8xi32> to vector<8x1xi32>
    %18 = vector.extract_strided_slice %0 {offsets = [0, 5], sizes = [8, 1], strides = [1, 1]} : vector<8x8xi32> to vector<8x1xi32>
    %c64_i32_5 = arith.constant 64 : i32
    %19 = vector.broadcast %c64_i32_5 : i32 to vector<8x1xi32>
    %20 = arith.addi %18, %19 : vector<8x1xi32>
    %21 = vector.broadcast %17 : vector<8x1xi32> to vector<8x80xi32>
    %22 = arith.cmpi eq, %1, %21 : vector<8x80xi32>
    %23 = vector.broadcast %20 : vector<8x1xi32> to vector<8x80xi32>
    %24 = arith.cmpi eq, %1, %23 : vector<8x80xi32>
    %25 = arith.ori %22, %24 : vector<8x80xi1>
    %26 = arith.extui %25 : vector<8x80xi1> to vector<8x80xi32>
    %27 = arith.sitofp %26 : vector<8x80xi32> to vector<8x80xf32>
    %c80 = arith.constant 80 : index
    %c0_6 = arith.constant 0 : index
    %28 = vector.load %arg2[%c80, %c0_6] : memref<320x128xf32, #tpu.memory_space<vmem>>, vector<80x128xf32>
    %cst_7 = arith.constant dense<0.000000e+00> : vector<8x128xf32>
    %29 = tpu.matmul %27, %28, %cst_7 {dimension_numbers = #tpu.dot_dimension_numbers<[1], [0], [0], [1], [0, 0, 1, 1], [], []>} : vector<8x80xf32>, vector<80x128xf32>, vector<8x128xf32> -> vector<8x128xf32>
    %30 = arith.addf %16, %29 : vector<8x128xf32>
    %31 = vector.extract_strided_slice %0 {offsets = [0, 2], sizes = [8, 1], strides = [1, 1]} : vector<8x8xi32> to vector<8x1xi32>
    %32 = vector.extract_strided_slice %0 {offsets = [0, 6], sizes = [8, 1], strides = [1, 1]} : vector<8x8xi32> to vector<8x1xi32>
    %c64_i32_8 = arith.constant 64 : i32
    %33 = vector.broadcast %c64_i32_8 : i32 to vector<8x1xi32>
    %34 = arith.addi %32, %33 : vector<8x1xi32>
    %35 = vector.broadcast %31 : vector<8x1xi32> to vector<8x80xi32>
    %36 = arith.cmpi eq, %1, %35 : vector<8x80xi32>
    %37 = vector.broadcast %34 : vector<8x1xi32> to vector<8x80xi32>
    %38 = arith.cmpi eq, %1, %37 : vector<8x80xi32>
    %39 = arith.ori %36, %38 : vector<8x80xi1>
    %40 = arith.extui %39 : vector<8x80xi1> to vector<8x80xi32>
    %41 = arith.sitofp %40 : vector<8x80xi32> to vector<8x80xf32>
    %c160 = arith.constant 160 : index
    %c0_9 = arith.constant 0 : index
    %42 = vector.load %arg2[%c160, %c0_9] : memref<320x128xf32, #tpu.memory_space<vmem>>, vector<80x128xf32>
    %cst_10 = arith.constant dense<0.000000e+00> : vector<8x128xf32>
    %43 = tpu.matmul %41, %42, %cst_10 {dimension_numbers = #tpu.dot_dimension_numbers<[1], [0], [0], [1], [0, 0, 1, 1], [], []>} : vector<8x80xf32>, vector<80x128xf32>, vector<8x128xf32> -> vector<8x128xf32>
    %44 = arith.addf %30, %43 : vector<8x128xf32>
    %45 = vector.extract_strided_slice %0 {offsets = [0, 3], sizes = [8, 1], strides = [1, 1]} : vector<8x8xi32> to vector<8x1xi32>
    %46 = vector.extract_strided_slice %0 {offsets = [0, 7], sizes = [8, 1], strides = [1, 1]} : vector<8x8xi32> to vector<8x1xi32>
    %c64_i32_11 = arith.constant 64 : i32
    %47 = vector.broadcast %c64_i32_11 : i32 to vector<8x1xi32>
    %48 = arith.addi %46, %47 : vector<8x1xi32>
    %49 = vector.broadcast %45 : vector<8x1xi32> to vector<8x80xi32>
    %50 = arith.cmpi eq, %1, %49 : vector<8x80xi32>
    %51 = vector.broadcast %48 : vector<8x1xi32> to vector<8x80xi32>
    %52 = arith.cmpi eq, %1, %51 : vector<8x80xi32>
    %53 = arith.ori %50, %52 : vector<8x80xi1>
    %54 = arith.extui %53 : vector<8x80xi1> to vector<8x80xi32>
    %55 = arith.sitofp %54 : vector<8x80xi32> to vector<8x80xf32>
    %c240 = arith.constant 240 : index
    %c0_12 = arith.constant 0 : index
    %56 = vector.load %arg2[%c240, %c0_12] : memref<320x128xf32, #tpu.memory_space<vmem>>, vector<80x128xf32>
    %cst_13 = arith.constant dense<0.000000e+00> : vector<8x128xf32>
    %57 = tpu.matmul %55, %56, %cst_13 {dimension_numbers = #tpu.dot_dimension_numbers<[1], [0], [0], [1], [0, 0, 1, 1], [], []>} : vector<8x80xf32>, vector<80x128xf32>, vector<8x128xf32> -> vector<8x128xf32>
    %58 = arith.addf %44, %57 : vector<8x128xf32>
    %c0_14 = arith.constant 0 : index
    %c0_15 = arith.constant 0 : index
    %59 = vector.load %arg4[%c0_14, %c0_15] : memref<8x128xf32, #tpu.memory_space<vmem>>, vector<8x128xf32>
    tpu.vector_store %arg4[%c0_14, %c0_15], %58 {strides = array<i32>} : memref<8x128xf32, #tpu.memory_space<vmem>>, vector<8x128xf32>,
    return
  }
  func.func @transform_0(%arg0: i32) -> (i32, i32) {
    %c0_i32 = arith.constant 0 : i32
    %c0_i32_0 = arith.constant 0 : i32
    return %arg0, %c0_i32 : i32, i32
  }
  func.func @transform_1(%arg0: i32) -> (i32, i32) {
    %c0_i32 = arith.constant 0 : i32
    %c0_i32_0 = arith.constant 0 : i32
    %c0_i32_1 = arith.constant 0 : i32
    return %c0_i32, %c0_i32_0 : i32, i32
  }
  func.func @transform_2(%arg0: i32) -> (i32, i32) {
    %c0_i32 = arith.constant 0 : i32
    %c0_i32_0 = arith.constant 0 : i32
    %c0_i32_1 = arith.constant 0 : i32
    return %c0_i32, %c0_i32_0 : i32, i32
  }
  func.func @transform_3(%arg0: i32) -> (i32, i32) {
    %c0_i32 = arith.constant 0 : i32
    %c0_i32_0 = arith.constant 0 : i32
    return %arg0, %c0_i32 : i32, i32
  }
}

</mosaic_0001>

<llo_original>
// kernel: forward.1
$region0: #{forward.1}
  #allocation0 [shape = 'u32[]', space=smem, size = 0x4, offset = 0x4, fixed_abs, tag = 'smem constant byte address 0x4 - core index']
  #allocation1 [shape = 'u32[144,128]{1,0:T(1,128)}', space=vmem, size = 0x12000, scoped, tag = 'internal scratch']
  %s0 = inlined_call_operand.vmem [shape: s32[16,8], index: 0, kind: input, shape index: {}]
  %s1 = inlined_call_operand.hbm [shape: f32[320,128], index: 1, kind: input, shape index: {}]
  %s2 = inlined_call_operand.hbm [shape: f32[1512,128], index: 2, kind: input, shape index: {}]
  %s3 = inlined_call_operand.vmem [shape: f32[16,128], index: 3, kind: output, shape index: {}]
  %s4 = sld [smem:[#allocation0]]
  $region53: #{forward.1} parent=0
    _
  %s6 = ssub.s32 1, %s4
  %s7 = scalar_select 0, %s6, %s4
  $region1: #{forward.1} parent=0
    #allocation2 [shape = 'u8[163840]{0}', space=vmem, size = 0x28000, scoped, tag = 'input window, operand 1, single buffered']
    #allocation3 [shape = 's32[2]{0}', space=sflag, size = 0x8, scoped, tag = 'scoped memory for forward.1']
    #allocation4 [shape = 'u8[4096]{0}', space=vmem, size = 0x1000, scoped, tag = 'input window, operand 2, single buffered']
    #allocation5 [shape = 's32[1]{0}', space=sflag, size = 0x4, scoped, tag = 'scoped memory for forward.1']
    %8 = vsyncpa [#allocation3], 0
    %9 = vsyncpa [#allocation5], 0
    loop: start=0, step=1, limit=4
    $region2: #{forward.1} parent=1 // loop_pre_header
      _
    $region3: #{forward.1} parent=1 // loop_header
      %s11 = sphi 0, %s15
      %p12 = scmp.ge.s32.totalorder %s11, 4
      %s21 = sphi 0, %s23
      %s24 = sphi 0, %s21
      %s25 = sphi 0, %s24
      %s41 = sphi 0, %s25
      %s45 = sphi 0, %s45
      %s47 = sphi 0, %s45
      %s48 = sphi 0, %s47
      %s62 = sphi 0, %s48
      %s66 = sphi 0, %s66
      %s68 = sphi 0, %s66
      %s69 = sphi 0, %s68
      %s83 = sphi 0, %s69
      %s89 = sphi 0, %s91
      %s92 = sphi 0, %s89
      %s93 = sphi 0, %s92
      %s109 = sphi 0, %s93
    $region4: #{forward.1} parent=1 // loop_header_branch
      %14 = sbr.rel (%p12) target = $region8
    $region5: #{forward.1} parent=1 // loop_body
      %s16 = ssub.s32 %s11, 1
      %s17 = ssub.s32 %s11, 2
      %s18 = sadd.s32 %s11, 1
      %s19 = ssub.s32 %s11, %s18
      %p20 = scmp.eq.s32.totalorder %s19, 0
      %s22 = sadd.s32 %s21, 1
      %s23 = scalar_select %p20, %s21, %s22
      %p26 = pneg %p20
      %p27 = scmp.eq.s32.totalorder %s11, 1
      %p28 = por %p26, %p27
      %p29 = scmp.ne.s32.totalorder %s21, %s24
      %p30 = scmp.eq.s32.totalorder %s11, 0
      %p31 = por %p29, %p30
      %p32 = scmp.ne.s32.totalorder %s21, %s24
      %p33 = scmp.eq.s32.totalorder %s16, 1
      %p34 = por %p32, %p33
      %p35 = scmp.ne.s32.totalorder %s24, %s25
      %p36 = scmp.eq.s32.totalorder %s16, 0
      %p37 = por %p35, %p36
      %p38 = scmp.ne.s32.totalorder %s24, %s25
      %p39 = scmp.eq.s32.totalorder %s17, 1
      %p40 = por %p38, %p39
      %p42 = scmp.ne.s32.totalorder %s25, %s41
      %p43 = scmp.eq.s32.totalorder %s17, 0
      %p44 = por %p42, %p43
      %s46 = sadd.s32 %s45, 1
      %p49 = scmp.eq.s32.totalorder %s11, 1
      %p50 = scmp.ne.s32.totalorder %s45, %s47
      %p51 = scmp.eq.s32.totalorder %s11, 0
      %p52 = por %p50, %p51
      %p53 = scmp.ne.s32.totalorder %s45, %s47
      %p54 = scmp.eq.s32.totalorder %s16, 1
      %p55 = por %p53, %p54
      %p56 = scmp.ne.s32.totalorder %s47, %s48
      %p57 = scmp.eq.s32.totalorder %s16, 0
      %p58 = por %p56, %p57
      %p59 = scmp.ne.s32.totalorder %s47, %s48
      %p60 = scmp.eq.s32.totalorder %s17, 1
      %p61 = por %p59, %p60
      %p63 = scmp.ne.s32.totalorder %s48, %s62
      %p64 = scmp.eq.s32.totalorder %s17, 0
      %p65 = por %p63, %p64
      %s67 = sadd.s32 %s66, 1
      %p70 = scmp.eq.s32.totalorder %s11, 1
      %p71 = scmp.ne.s32.totalorder %s66, %s68
      %p72 = scmp.eq.s32.totalorder %s11, 0
      %p73 = por %p71, %p72
      %p74 = scmp.ne.s32.totalorder %s66, %s68
      %p75 = scmp.eq.s32.totalorder %s16, 1
      %p76 = por %p74, %p75
      %p77 = scmp.ne.s32.totalorder %s68, %s69
      %p78 = scmp.eq.s32.totalorder %s16, 0
      %p79 = por %p77, %p78
      %p80 = scmp.ne.s32.totalorder %s68, %s69
      %p81 = scmp.eq.s32.totalorder %s17, 1
      %p82 = por %p80, %p81
      %p84 = scmp.ne.s32.totalorder %s69, %s83
      %p85 = scmp.eq.s32.totalorder %s17, 0
      %p86 = por %p84, %p85
      %s87 = ssub.s32 %s11, %s18
      %p88 = scmp.eq.s32.totalorder %s87, 0
      %s90 = sadd.s32 %s89, 1
      %s91 = scalar_select %p88, %s89, %s90
      %p94 = pneg %p88
      %p95 = scmp.eq.s32.totalorder %s11, 1
      %p96 = por %p94, %p95
      %p97 = scmp.ne.s32.totalorder %s89, %s92
      %p98 = scmp.eq.s32.totalorder %s11, 0
      %p99 = por %p97, %p98
      %p100 = scmp.ne.s32.totalorder %s89, %s92
      %p101 = scmp.eq.s32.totalorder %s16, 1
      %p102 = por %p100, %p101
      %p103 = scmp.ne.s32.totalorder %s92, %s93
      %p104 = scmp.eq.s32.totalorder %s16, 0
      %p105 = por %p103, %p104
      %p106 = scmp.ne.s32.totalorder %s92, %s93
      %p107 = scmp.eq.s32.totalorder %s17, 1
      %p108 = por %p106, %p107
      %p110 = scmp.ne.s32.totalorder %s93, %s109
      %p111 = scmp.eq.s32.totalorder %s17, 0
      %p112 = por %p110, %p111
      %p113 = scmp.le.s32.totalorder 1, %s11
      %p114 = scmp.lt.s32.totalorder %s11, 3
      %p115 = pnand %p113, %p114
      %p116 = pneg %p115
      // Predicated region
      $region9: #{forward.1} parent=5 // pred_check
        _
      $region10: #{forward.1} parent=5 // pred_check_branch
        %118 = sbr.rel (%p115) target = $region12
      $region11: #{forward.1} parent=5 // pred_region
        %s119 = ssub.s32 %s11, 1
        // Predicated region
        $region13: #{forward.1} parent=11 // pred_check
          %p120 = pneg %p58
        $region14: #{forward.1} parent=11 // pred_check_branch
          %122 = sbr.rel (%p120) target = $region16
        $region15: #{forward.1} parent=11 // pred_region
          %s124 = ssub.s32 5120, 5120
          %125 = vsyncadd [#allocation3], %s124
          %s126 = sshll.u32 [#allocation2], 4
          %s127 = int_to_ptr.vmem [resolvable:$true] %s126
          %132 = dma.hbm_to_vmem [thread:$0]  %s1, 5120, %s127, [#allocation3], 128, 128, 8
        $region16: #{forward.1} parent=11 // pred_fallthru
          _
        // Predicated region
        $region17: #{forward.1} parent=11 // pred_check
          %p133 = pneg %p79
        $region18: #{forward.1} parent=11 // pred_check_branch
          %135 = sbr.rel (%p133) target = $region20
        $region19: #{forward.1} parent=11 // pred_region
          %s137 = ssub.s32 128, 128
          %138 = vsyncadd [#allocation5], %s137
          %s140 = sshll.u32 [#allocation4], 4
          %s141 = int_to_ptr.vmem [resolvable:$true] %s140
          %143 = dma.hbm_to_vmem [thread:$0]  %s2, 128, %s141, [#allocation5]
        $region20: #{forward.1} parent=11 // pred_fallthru
          _
      $region12: #{forward.1} parent=5 // pred_fallthru
        _
      %p144 = scmp.lt.s32.totalorder %s11, 2
      // Predicated region
      $region21: #{forward.1} parent=5 // pred_check
        %p145 = pneg %p144
      $region22: #{forward.1} parent=5 // pred_check_branch
        %147 = sbr.rel (%p145) target = $region24
      $region23: #{forward.1} parent=5 // pred_region
        // Predicated region
        $region25: #{forward.1} parent=23 // pred_check
          %p148 = pneg %p31
        $region26: #{forward.1} parent=23 // pred_check_branch
          %150 = sbr.rel (%p148) target = $region28
        $region27: #{forward.1} parent=23 // pred_region
          %p151 = scmp.lt.s32.totalorder %s11, 1
          %s152 = scalar_select %p151, %s11, 1
          %s153 = smul.addr %s152, 8
          %s154 = scalar_lea.vmem %s0, %s153
        $region28: #{forward.1} parent=23 // pred_fallthru
          _
      $region24: #{forward.1} parent=5 // pred_fallthru
        _
      %p155 = scmp.le.s32.totalorder 1, %s11
      %p156 = scmp.lt.s32.totalorder %s11, 3
      %p157 = pnand %p155, %p156
      %p158 = pneg %p157
      // Predicated region
      $region29: #{forward.1} parent=5 // pred_check
        _
      $region30: #{forward.1} parent=5 // pred_check_branch
        %160 = sbr.rel (%p157) target = $region32
      $region31: #{forward.1} parent=5 // pred_region
        %s161 = ssub.s32 %s11, 1
        // Predicated region
        $region33: #{forward.1} parent=31 // pred_check
          %p162 = pneg %p58
        $region34: #{forward.1} parent=31 // pred_check_branch
          %164 = sbr.rel (%p162) target = $region36
        $region35: #{forward.1} parent=31 // pred_region
          %165 = dma.done [#allocation3], 5120
        $region36: #{forward.1} parent=31 // pred_fallthru
          _
        // Predicated region
        $region37: #{forward.1} parent=31 // pred_check
          %p166 = pneg %p79
        $region38: #{forward.1} parent=31 // pred_check_branch
          %168 = sbr.rel (%p166) target = $region40
        $region39: #{forward.1} parent=31 // pred_region
          %169 = dma.done [#allocation5], 128
        $region40: #{forward.1} parent=31 // pred_fallthru
          _
        %p170 = scmp.lt.s32.totalorder %s16, 1
        %s171 = scalar_select %p170, %s16, 1
        %s172 = smul.addr %s171, 8
        %s173 = scalar_lea.vmem %s0, %s172
        %p174 = pneg %p37
        %p175 = pneg %p34
        %p176 = pneg %p58
        %p177 = pneg %p55
        %p178 = pneg %p79
        %p179 = pneg %p76
        %p180 = pneg %p105
        %p181 = pneg %p102
        %p182 = scmp.lt.s32.totalorder %s16, 1
        %s183 = scalar_select %p182, %s16, 1
        %s184 = smul.addr %s183, 8
        %s185 = scalar_lea.vmem %s3, %s184
        %p186 = scmp.lt.s32.totalorder %s16, 1
        %s187 = scalar_select %p186, %s16, 1
        %s188 = smul.addr %s187, 8
        %s189 = scalar_lea.vmem %s0, %s188
        %p190 = scmp.lt.s32.totalorder %s16, 1
        %s191 = scalar_select %p190, %s16, 1
        %s192 = smul.addr %s191, 8
        %s193 = scalar_lea.vmem %s3, %s192
        %v194 = vld [vmem:[%s189] sm:$0xff]
        %v195 = vlaneseq
        %v196 = vand.u32 %v195, 127
        %v197 = vld [vmem:[#allocation4] sm:$0xff]
        %v198 = vadd.s32 %v194, 64
        %199 = vset.pattern.permute.xlu0 0
        %200 = vperm.xlu0 %199, %v194
        %v201 = vpop.permute.xlu0 %200
        %vm202 = vcmp.eq.s32.totalorder %v196, %v201
        %203 = vset.pattern.permute.xlu0 4
        %204 = vperm.xlu0 %203, %v198
        %v205 = vpop.permute.xlu0 %204
        %vm206 = vcmp.eq.s32.totalorder %v196, %v205
        %vm207 = vmor %vm202, %vm206
        %v208 = vsel %vm207, 1, 0
        %v209 = vcvt.s32.f32 %v208
        %v210 = vld [vmem:[#allocation2] sm:$0xff]
        %v211 = vld [vmem:[#allocation2 + $0x8] sm:$0xff]
        %v212 = vld [vmem:[#allocation2 + $0x10] sm:$0xff]
        %v213 = vld [vmem:[#allocation2 + $0x18] sm:$0xff]
        %v214 = vld [vmem:[#allocation2 + $0x20] sm:$0xff]
        %v215 = vld [vmem:[#allocation2 + $0x28] sm:$0xff]
        %v216 = vld [vmem:[#allocation2 + $0x30] sm:$0xff]
        %v217 = vld [vmem:[#allocation2 + $0x38] sm:$0xff]
        %v218 = vld [vmem:[#allocation2 + $0x40] sm:$0xff]
        %v219 = vld [vmem:[#allocation2 + $0x48] sm:$0xff]
        %vm220 = vcmask 654336
        %v222 = vsel %vm220, %v209, 0
        %224 = vmatprep.subr.mxu0 0.0
        %225 = vmatpush1.msra.mxu0 0.0
        %226 = vmatprep.subr.mxu0 0.0
        %227 = vmatpush1.msra.mxu0 0.0
        %228 = vmatprep.subr.mxu0 0.0
        %229 = vmatpush1.msra.mxu0 0.0
        %230 = vmatprep.subr.mxu0 0.0
        %231 = vmatpush1.msra.mxu0 0.0
        %232 = vmatprep.subr.mxu0 0.0
        %233 = vmatpush1.msra.mxu0 0.0
        %234 = vmatprep.subr.mxu0 0.0
        %235 = vmatpush1.msra.mxu0 0.0
        %236 = vmatprep.subr.mxu0 0.0
        %237 = vmatpush1.msra.mxu0 %v219
        %238 = vmatprep.subr.mxu0 0.0
        %239 = vmatpush1.msra.mxu0 %v218
        %240 = vmatprep.subr.mxu0 0.0
        %241 = vmatpush1.msra.mxu0 %v217
        %242 = vmatprep.subr.mxu0 0.0
        %243 = vmatpush1.msra.mxu0 %v216
        %244 = vmatprep.subr.mxu0 0.0
        %245 = vmatpush1.msra.mxu0 %v215
        %246 = vmatprep.subr.mxu0 0.0
        %247 = vmatpush1.msra.mxu0 %v214
        %248 = vmatprep.subr.mxu0 0.0
        %249 = vmatpush1.msra.mxu0 %v213
        %250 = vmatprep.subr.mxu0 0.0
        %251 = vmatpush1.msra.mxu0 %v212
        %252 = vmatprep.subr.mxu0 0.0
        %253 = vmatpush1.msra.mxu0 %v211
        %254 = vmatprep.subr.mxu0 0.0
        %255 = vmatpush1.msra.mxu0 %v210
        %256 = vmatprep.subr.mxu0 0.0
        %257 = vmatpush2.msra.mxu0 0.0
        %258 = vmatprep.subr.mxu0 0.0
        %259 = vmatpush2.msra.mxu0 0.0
        %260 = vmatprep.subr.mxu0 0.0
        %261 = vmatpush2.msra.mxu0 0.0
        %262 = vmatprep.subr.mxu0 0.0
        %263 = vmatpush2.msra.mxu0 0.0
        %264 = vmatprep.subr.mxu0 0.0
        %265 = vmatpush2.msra.mxu0 0.0
        %266 = vmatprep.subr.mxu0 0.0
        %267 = vmatpush2.msra.mxu0 0.0
        %268 = vmatprep.subr.mxu0 0.0
        %269 = vmatpush2.msra.mxu0 0.0
        %270 = vmatprep.subr.mxu0 0.0
        %271 = vmatpush2.msra.mxu0 0.0
        %272 = vmatprep.subr.mxu0 0.0
        %273 = vmatpush2.msra.mxu0 0.0
        %274 = vmatprep.subr.mxu0 0.0
        %275 = vmatpush2.msra.mxu0 0.0
        %276 = vmatprep.subr.mxu0 0.0
        %277 = vmatpush2.msra.mxu0 0.0
        %278 = vmatprep.subr.mxu0 0.0
        %279 = vmatpush2.msra.mxu0 0.0
        %280 = vmatprep.subr.mxu0 0.0
        %281 = vmatpush2.msra.mxu0 0.0
        %282 = vmatprep.subr.mxu0 0.0
        %283 = vmatpush2.msra.mxu0 0.0
        %284 = vmatprep.subr.mxu0 0.0
        %285 = vmatpush2.msra.mxu0 0.0
        %286 = vmatprep.subr.mxu0 0.0
        %287 = vmatpush2.msra.mxu0 0.0
        %288 = vmatprep.mubr.f32.mxu0 0.0
        %289 = vmatmul.mubr.f32.gmra.mxu0 %v222
        %v290 = vpop.f32.mrf.mxu0
        %v291 = vadd.f32 0.0, %v290
        %v292 = vpop.f32.mrf.mxu0
        %293 = vdwg.mxu0
        %v294 = vadd.f32 %v197, %v291
        %295 = vset.pattern.permute.xlu0 1
        %296 = vperm.xlu0 %295, %v194
        %v297 = vpop.permute.xlu0 %296
        %vm298 = vcmp.eq.s32.totalorder %v196, %v297
        %299 = vset.pattern.permute.xlu0 5
        %300 = vperm.xlu0 %299, %v198
        %v301 = vpop.permute.xlu0 %300
        %vm302 = vcmp.eq.s32.totalorder %v196, %v301
        %vm303 = vmor %vm298, %vm302
        %v304 = vsel %vm303, 1, 0
        %v305 = vcvt.s32.f32 %v304
        %v306 = vld [vmem:[#allocation2 + $0x50] sm:$0xff]
        %v307 = vld [vmem:[#allocation2 + $0x58] sm:$0xff]
        %v308 = vld [vmem:[#allocation2 + $0x60] sm:$0xff]
        %v309 = vld [vmem:[#allocation2 + $0x68] sm:$0xff]
        %v310 = vld [vmem:[#allocation2 + $0x70] sm:$0xff]
        %v311 = vld [vmem:[#allocation2 + $0x78] sm:$0xff]
        %v312 = vld [vmem:[#allocation2 + $0x80] sm:$0xff]
        %v313 = vld [vmem:[#allocation2 + $0x88] sm:$0xff]
        %v314 = vld [vmem:[#allocation2 + $0x90] sm:$0xff]
        %v315 = vld [vmem:[#allocation2 + $0x98] sm:$0xff]
        %v317 = vsel %vm220, %v305, 0
        %319 = vmatprep.subr.mxu0 0.0
        %320 = vmatpush1.msra.mxu0 0.0
        %321 = vmatprep.subr.mxu0 0.0
        %322 = vmatpush1.msra.mxu0 0.0
        %323 = vmatprep.subr.mxu0 0.0
        %324 = vmatpush1.msra.mxu0 0.0
        %325 = vmatprep.subr.mxu0 0.0
        %326 = vmatpush1.msra.mxu0 0.0
        %327 = vmatprep.subr.mxu0 0.0
        %328 = vmatpush1.msra.mxu0 0.0
        %329 = vmatprep.subr.mxu0 0.0
        %330 = vmatpush1.msra.mxu0 0.0
        %331 = vmatprep.subr.mxu0 0.0
        %332 = vmatpush1.msra.mxu0 %v315
        %333 = vmatprep.subr.mxu0 0.0
        %334 = vmatpush1.msra.mxu0 %v314
        %335 = vmatprep.subr.mxu0 0.0
        %336 = vmatpush1.msra.mxu0 %v313
        %337 = vmatprep.subr.mxu0 0.0
        %338 = vmatpush1.msra.mxu0 %v312
        %339 = vmatprep.subr.mxu0 0.0
        %340 = vmatpush1.msra.mxu0 %v311
        %341 = vmatprep.subr.mxu0 0.0
        %342 = vmatpush1.msra.mxu0 %v310
        %343 = vmatprep.subr.mxu0 0.0
        %344 = vmatpush1.msra.mxu0 %v309
        %345 = vmatprep.subr.mxu0 0.0
        %346 = vmatpush1.msra.mxu0 %v308
        %347 = vmatprep.subr.mxu0 0.0
        %348 = vmatpush1.msra.mxu0 %v307
        %349 = vmatprep.subr.mxu0 0.0
        %350 = vmatpush1.msra.mxu0 %v306
        %351 = vmatprep.subr.mxu0 0.0
        %352 = vmatpush2.msra.mxu0 0.0
        %353 = vmatprep.subr.mxu0 0.0
        %354 = vmatpush2.msra.mxu0 0.0
        %355 = vmatprep.subr.mxu0 0.0
        %356 = vmatpush2.msra.mxu0 0.0
        %357 = vmatprep.subr.mxu0 0.0
        %358 = vmatpush2.msra.mxu0 0.0
        %359 = vmatprep.subr.mxu0 0.0
        %360 = vmatpush2.msra.mxu0 0.0
        %361 = vmatprep.subr.mxu0 0.0
        %362 = vmatpush2.msra.mxu0 0.0
        %363 = vmatprep.subr.mxu0 0.0
        %364 = vmatpush2.msra.mxu0 0.0
        %365 = vmatprep.subr.mxu0 0.0
        %366 = vmatpush2.msra.mxu0 0.0
        %367 = vmatprep.subr.mxu0 0.0
        %368 = vmatpush2.msra.mxu0 0.0
        %369 = vmatprep.subr.mxu0 0.0
        %370 = vmatpush2.msra.mxu0 0.0
        %371 = vmatprep.subr.mxu0 0.0
        %372 = vmatpush2.msra.mxu0 0.0
        %373 = vmatprep.subr.mxu0 0.0
        %374 = vmatpush2.msra.mxu0 0.0
        %375 = vmatprep.subr.mxu0 0.0
        %376 = vmatpush2.msra.mxu0 0.0
        %377 = vmatprep.subr.mxu0 0.0
        %378 = vmatpush2.msra.mxu0 0.0
        %379 = vmatprep.subr.mxu0 0.0
        %380 = vmatpush2.msra.mxu0 0.0
        %381 = vmatprep.subr.mxu0 0.0
        %382 = vmatpush2.msra.mxu0 0.0
        %383 = vmatprep.mubr.f32.mxu0 0.0
        %384 = vmatmul.mubr.f32.gmra.mxu0 %v317
        %v385 = vpop.f32.mrf.mxu0
        %v386 = vadd.f32 0.0, %v385
        %v387 = vpop.f32.mrf.mxu0
        %388 = vdwg.mxu0
        %v389 = vadd.f32 %v294, %v386
        %390 = vset.pattern.permute.xlu0 2
        %391 = vperm.xlu0 %390, %v194
        %v392 = vpop.permute.xlu0 %391
        %vm393 = vcmp.eq.s32.totalorder %v196, %v392
        %394 = vset.pattern.permute.xlu0 6
        %395 = vperm.xlu0 %394, %v198
        %v396 = vpop.permute.xlu0 %395
        %vm397 = vcmp.eq.s32.totalorder %v196, %v396
        %vm398 = vmor %vm393, %vm397
        %v399 = vsel %vm398, 1, 0
        %v400 = vcvt.s32.f32 %v399
        %v401 = vld [vmem:[#allocation2 + $0xa0] sm:$0xff]
        %v402 = vld [vmem:[#allocation2 + $0xa8] sm:$0xff]
        %v403 = vld [vmem:[#allocation2 + $0xb0] sm:$0xff]
        %v404 = vld [vmem:[#allocation2 + $0xb8] sm:$0xff]
        %v405 = vld [vmem:[#allocation2 + $0xc0] sm:$0xff]
        %v406 = vld [vmem:[#allocation2 + $0xc8] sm:$0xff]
        %v407 = vld [vmem:[#allocation2 + $0xd0] sm:$0xff]
        %v408 = vld [vmem:[#allocation2 + $0xd8] sm:$0xff]
        %v409 = vld [vmem:[#allocation2 + $0xe0] sm:$0xff]
        %v410 = vld [vmem:[#allocation2 + $0xe8] sm:$0xff]
        %v412 = vsel %vm220, %v400, 0
        %414 = vmatprep.subr.mxu0 0.0
        %415 = vmatpush1.msra.mxu0 0.0
        %416 = vmatprep.subr.mxu0 0.0
        %417 = vmatpush1.msra.mxu0 0.0
        %418 = vmatprep.subr.mxu0 0.0
        %419 = vmatpush1.msra.mxu0 0.0
        %420 = vmatprep.subr.mxu0 0.0
        %421 = vmatpush1.msra.mxu0 0.0
        %422 = vmatprep.subr.mxu0 0.0
        %423 = vmatpush1.msra.mxu0 0.0
        %424 = vmatprep.subr.mxu0 0.0
        %425 = vmatpush1.msra.mxu0 0.0
        %426 = vmatprep.subr.mxu0 0.0
        %427 = vmatpush1.msra.mxu0 %v410
        %428 = vmatprep.subr.mxu0 0.0
        %429 = vmatpush1.msra.mxu0 %v409
        %430 = vmatprep.subr.mxu0 0.0
        %431 = vmatpush1.msra.mxu0 %v408
        %432 = vmatprep.subr.mxu0 0.0
        %433 = vmatpush1.msra.mxu0 %v407
        %434 = vmatprep.subr.mxu0 0.0
        %435 = vmatpush1.msra.mxu0 %v406
        %436 = vmatprep.subr.mxu0 0.0
        %437 = vmatpush1.msra.mxu0 %v405
        %438 = vmatprep.subr.mxu0 0.0
        %439 = vmatpush1.msra.mxu0 %v404
        %440 = vmatprep.subr.mxu0 0.0
        %441 = vmatpush1.msra.mxu0 %v403
        %442 = vmatprep.subr.mxu0 0.0
        %443 = vmatpush1.msra.mxu0 %v402
        %444 = vmatprep.subr.mxu0 0.0
        %445 = vmatpush1.msra.mxu0 %v401
        %446 = vmatprep.subr.mxu0 0.0
        %447 = vmatpush2.msra.mxu0 0.0
        %448 = vmatprep.subr.mxu0 0.0
        %449 = vmatpush2.msra.mxu0 0.0
        %450 = vmatprep.subr.mxu0 0.0
        %451 = vmatpush2.msra.mxu0 0.0
        %452 = vmatprep.subr.mxu0 0.0
        %453 = vmatpush2.msra.mxu0 0.0
        %454 = vmatprep.subr.mxu0 0.0
        %455 = vmatpush2.msra.mxu0 0.0
        %456 = vmatprep.subr.mxu0 0.0
        %457 = vmatpush2.msra.mxu0 0.0
        %458 = vmatprep.subr.mxu0 0.0
        %459 = vmatpush2.msra.mxu0 0.0
        %460 = vmatprep.subr.mxu0 0.0
        %461 = vmatpush2.msra.mxu0 0.0
        %462 = vmatprep.subr.mxu0 0.0
        %463 = vmatpush2.msra.mxu0 0.0
        %464 = vmatprep.subr.mxu0 0.0
        %465 = vmatpush2.msra.mxu0 0.0
        %466 = vmatprep.subr.mxu0 0.0
        %467 = vmatpush2.msra.mxu0 0.0
        %468 = vmatprep.subr.mxu0 0.0
        %469 = vmatpush2.msra.mxu0 0.0
        %470 = vmatprep.subr.mxu0 0.0
        %471 = vmatpush2.msra.mxu0 0.0
        %472 = vmatprep.subr.mxu0 0.0
        %473 = vmatpush2.msra.mxu0 0.0
        %474 = vmatprep.subr.mxu0 0.0
        %475 = vmatpush2.msra.mxu0 0.0
        %476 = vmatprep.subr.mxu0 0.0
        %477 = vmatpush2.msra.mxu0 0.0
        %478 = vmatprep.mubr.f32.mxu0 0.0
        %479 = vmatmul.mubr.f32.gmra.mxu0 %v412
        %v480 = vpop.f32.mrf.mxu0
        %v481 = vadd.f32 0.0, %v480
        %v482 = vpop.f32.mrf.mxu0
        %483 = vdwg.mxu0
        %v484 = vadd.f32 %v389, %v481
        %485 = vset.pattern.permute.xlu0 3
        %486 = vperm.xlu0 %485, %v194
        %v487 = vpop.permute.xlu0 %486
        %vm488 = vcmp.eq.s32.totalorder %v196, %v487
        %489 = vset.pattern.permute.xlu0 7
        %490 = vperm.xlu0 %489, %v198
        %v491 = vpop.permute.xlu0 %490
        %vm492 = vcmp.eq.s32.totalorder %v196, %v491
        %vm493 = vmor %vm488, %vm492
        %v494 = vsel %vm493, 1, 0
        %v495 = vcvt.s32.f32 %v494
        %v496 = vld [vmem:[#allocation2 + $0xf0] sm:$0xff]
        %v497 = vld [vmem:[#allocation2 + $0xf8] sm:$0xff]
        %v498 = vld [vmem:[#allocation2 + $0x100] sm:$0xff]
        %v499 = vld [vmem:[#allocation2 + $0x108] sm:$0xff]
        %v500 = vld [vmem:[#allocation2 + $0x110] sm:$0xff]
        %v501 = vld [vmem:[#allocation2 + $0x118] sm:$0xff]
        %v502 = vld [vmem:[#allocation2 + $0x120] sm:$0xff]
        %v503 = vld [vmem:[#allocation2 + $0x128] sm:$0xff]
        %v504 = vld [vmem:[#allocation2 + $0x130] sm:$0xff]
        %v505 = vld [vmem:[#allocation2 + $0x138] sm:$0xff]
        %v507 = vsel %vm220, %v495, 0
        %509 = vmatprep.subr.mxu0 0.0
        %510 = vmatpush1.msra.mxu0 0.0
        %511 = vmatprep.subr.mxu0 0.0
        %512 = vmatpush1.msra.mxu0 0.0
        %513 = vmatprep.subr.mxu0 0.0
        %514 = vmatpush1.msra.mxu0 0.0
        %515 = vmatprep.subr.mxu0 0.0
        %516 = vmatpush1.msra.mxu0 0.0
        %517 = vmatprep.subr.mxu0 0.0
        %518 = vmatpush1.msra.mxu0 0.0
        %519 = vmatprep.subr.mxu0 0.0
        %520 = vmatpush1.msra.mxu0 0.0
        %521 = vmatprep.subr.mxu0 0.0
        %522 = vmatpush1.msra.mxu0 %v505
        %523 = vmatprep.subr.mxu0 0.0
        %524 = vmatpush1.msra.mxu0 %v504
        %525 = vmatprep.subr.mxu0 0.0
        %526 = vmatpush1.msra.mxu0 %v503
        %527 = vmatprep.subr.mxu0 0.0
        %528 = vmatpush1.msra.mxu0 %v502
        %529 = vmatprep.subr.mxu0 0.0
        %530 = vmatpush1.msra.mxu0 %v501
        %531 = vmatprep.subr.mxu0 0.0
        %532 = vmatpush1.msra.mxu0 %v500
        %533 = vmatprep.subr.mxu0 0.0
        %534 = vmatpush1.msra.mxu0 %v499
        %535 = vmatprep.subr.mxu0 0.0
        %536 = vmatpush1.msra.mxu0 %v498
        %537 = vmatprep.subr.mxu0 0.0
        %538 = vmatpush1.msra.mxu0 %v497
        %539 = vmatprep.subr.mxu0 0.0
        %540 = vmatpush1.msra.mxu0 %v496
        %541 = vmatprep.subr.mxu0 0.0
        %542 = vmatpush2.msra.mxu0 0.0
        %543 = vmatprep.subr.mxu0 0.0
        %544 = vmatpush2.msra.mxu0 0.0
        %545 = vmatprep.subr.mxu0 0.0
        %546 = vmatpush2.msra.mxu0 0.0
        %547 = vmatprep.subr.mxu0 0.0
        %548 = vmatpush2.msra.mxu0 0.0
        %549 = vmatprep.subr.mxu0 0.0
        %550 = vmatpush2.msra.mxu0 0.0
        %551 = vmatprep.subr.mxu0 0.0
        %552 = vmatpush2.msra.mxu0 0.0
        %553 = vmatprep.subr.mxu0 0.0
        %554 = vmatpush2.msra.mxu0 0.0
        %555 = vmatprep.subr.mxu0 0.0
        %556 = vmatpush2.msra.mxu0 0.0
        %557 = vmatprep.subr.mxu0 0.0
        %558 = vmatpush2.msra.mxu0 0.0
        %559 = vmatprep.subr.mxu0 0.0
        %560 = vmatpush2.msra.mxu0 0.0
        %561 = vmatprep.subr.mxu0 0.0
        %562 = vmatpush2.msra.mxu0 0.0
        %563 = vmatprep.subr.mxu0 0.0
        %564 = vmatpush2.msra.mxu0 0.0
        %565 = vmatprep.subr.mxu0 0.0
        %566 = vmatpush2.msra.mxu0 0.0
        %567 = vmatprep.subr.mxu0 0.0
        %568 = vmatpush2.msra.mxu0 0.0
        %569 = vmatprep.subr.mxu0 0.0
        %570 = vmatpush2.msra.mxu0 0.0
        %571 = vmatprep.subr.mxu0 0.0
        %572 = vmatpush2.msra.mxu0 0.0
        %573 = vmatprep.mubr.f32.mxu0 0.0
        %574 = vmatmul.mubr.f32.gmra.mxu0 %v507
        %v575 = vpop.f32.mrf.mxu0
        %v576 = vadd.f32 0.0, %v575
        %v577 = vpop.f32.mrf.mxu0
        %578 = vdwg.mxu0
        %v579 = vadd.f32 %v484, %v576
        %580 = vst [vmem:[%s193] sm:$0xff] %v579
        %p581 = scmp.lt.s32.totalorder %s16, 1
        %s582 = scalar_select %p581, %s16, 1
        %s583 = smul.addr %s582, 8
        %s584 = scalar_lea.vmem %s3, %s583
        // Predicated region
        $region41: #{forward.1} parent=31 // pred_check
          %p585 = pneg %p102
        $region42: #{forward.1} parent=31 // pred_check_branch
          %587 = sbr.rel (%p585) target = $region44
        $region43: #{forward.1} parent=31 // pred_region
          _
        $region44: #{forward.1} parent=31 // pred_fallthru
          _
      $region32: #{forward.1} parent=5 // pred_fallthru
        _
      %p588 = scmp.le.s32.totalorder 2, %s11
      // Predicated region
      $region45: #{forward.1} parent=5 // pred_check
        %p589 = pneg %p588
      $region46: #{forward.1} parent=5 // pred_check_branch
        %591 = sbr.rel (%p589) target = $region48
      $region47: #{forward.1} parent=5 // pred_region
        %s592 = ssub.s32 %s11, 2
        // Predicated region
        $region49: #{forward.1} parent=47 // pred_check
          %p593 = pneg %p108
        $region50: #{forward.1} parent=47 // pred_check_branch
          %595 = sbr.rel (%p593) target = $region52
        $region51: #{forward.1} parent=47 // pred_region
          %p596 = scmp.lt.s32.totalorder %s17, 1
          %s597 = scalar_select %p596, %s17, 1
          %s598 = smul.addr %s597, 8
          %s599 = scalar_lea.vmem %s3, %s598
        $region52: #{forward.1} parent=47 // pred_fallthru
          _
      $region48: #{forward.1} parent=5 // pred_fallthru
        _
    $region6: #{forward.1} parent=1 // loop_footer
      %s15 = sadd.s32 1, %s11
    $region7: #{forward.1} parent=1 // loop_footer_branch
      %10 = sbr.rel target = $region3
    $region8: #{forward.1} parent=1 // loop_exit
      _
    %600 = vsyncpa [#allocation3], 1
    %s601 = scalar_lea.sflag [#allocation3], 1
    %602 = vsyncpa %s601, 1
    %603 = vsyncpa [#allocation5], 1

</llo_original>
